<compile_context>
chip_gen: v5e
topology: v5e:2x2
jax: 0.10.0
libtpu: 0.0.40
codegen_flags: <defaults>
</compile_context>

<pallas_src>
import jax
import jax.numpy as jnp
from jax.experimental import pallas as pl
from jax.experimental.pallas import tpu as pltpu


def enc2dec_kernel(src_ref, x_ref, w_ref, bias_ref, mask_ref, out_ref):
    """Processes Bb batch elements per grid step.

    src_ref : VMEM [Bb, L+1, 1] int32  gather source row per output row
                                       (0 = cls, 1..n_vis = visible token,
                                        -1 = mask token)
    x_ref   : VMEM [Bb, N_tok, E]
    w_ref   : VMEM [E, Dp]
    bias_ref: VMEM [1, Dp]
    mask_ref: VMEM [1, Dp]
    out_ref : VMEM [Bb, L+1, Dp]
    """
    bb, n_tok, _ = x_ref.shape
    l_out = out_ref.shape[1]                       # L_full + 1

    # Hoist invariants out of the per-batch loop (broadcasts are not CSE'd).
    w = w_ref[...]                                 # [E, Dp]
    bias = bias_ref[...]                           # [1, Dp]
    mask_row = mask_ref[...]                       # [1, Dp]
    col = jax.lax.broadcasted_iota(jnp.int32, (l_out, n_tok), 1)

    for b in range(bb):                            # static unroll, small Bb
        # --- Linear projection (MXU) ------------------------------------
        proj = jnp.dot(x_ref[b], w, preferred_element_type=jnp.float32) + bias

        # --- vectorized unshuffle: one-hot permutation matmul on the MXU --
        src = src_ref[b]                           # [L+1, 1] int32
        p = (src == col).astype(jnp.float32)       # [L+1, N_tok]; src=-1 -> all-zero row
        gathered = jnp.dot(p, proj, preferred_element_type=jnp.float32)

        # --- blend mask-token rows, single dense store per batch element --
        out = jnp.where(src < 0, mask_row, gathered)
        out_ref[b] = out.astype(out_ref.dtype)


def _pick_batch_block(batch, max_block=8):
    """Largest divisor of `batch` that is <= max_block."""
    bb = 1
    for cand in range(1, min(batch, max_block) + 1):
        if batch % cand == 0:
            bb = cand
    return bb


def encoder_to_decoder(x, ids_restore, w, bias, mask_token, *, max_batch_block=8):
    """x: [B, N_tok, E]; ids_restore: [B, L]; w: [E, D]; bias/mask_token: [1, D]."""
    B, N_tok, E = x.shape
    L = ids_restore.shape[1]
    D = w.shape[1]
    n_vis = N_tok - 1

    # --- lane-dense output: pad decoder dim up to a multiple of 128 --------
    Dp = ((D + 127) // 128) * 128
    if Dp != D:
        pad = Dp - D
        w = jnp.pad(w, ((0, 0), (0, pad)))
        bias = jnp.pad(bias, ((0, 0), (0, pad)))
        mask_token = jnp.pad(mask_token, ((0, 0), (0, pad)))

    # --- per-output-row gather source (cls folded in; -1 marks mask token) --
    ids = ids_restore.astype(jnp.int32)
    src_body = jnp.where(ids < n_vis, ids + 1, -1)                      # [B, L]
    src = jnp.concatenate(
        [jnp.zeros((B, 1), jnp.int32), src_body], axis=1)[..., None]    # [B, L+1, 1]

    # --- batch blocking: Bb elements per grid step --------------------------
    # VMEM per step (double-buffered x/out blocks + resident w) stays well
    # inside the 32 MiB scoped default even at real MAE shapes with Bb = 8,
    # which also respects v7x's smaller (64 MiB physical) VMEM.
    Bb = _pick_batch_block(B, max_batch_block)
    grid = (B // Bb,)

    out = pl.pallas_call(
        enc2dec_kernel,
        out_shape=jax.ShapeDtypeStruct((B, L + 1, Dp), x.dtype),
        grid=grid,
        in_specs=[
            pl.BlockSpec((Bb, L + 1, 1), lambda g: (g, 0, 0)),    # src (VMEM int32)
            pl.BlockSpec((Bb, N_tok, E), lambda g: (g, 0, 0)),    # x
            pl.BlockSpec((E, Dp), lambda g: (0, 0)),              # w (resident)
            pl.BlockSpec((1, Dp), lambda g: (0, 0)),              # bias
            pl.BlockSpec((1, Dp), lambda g: (0, 0)),              # mask token
        ],
        out_specs=pl.BlockSpec((Bb, L + 1, Dp), lambda g: (g, 0, 0)),
        compiler_params=pltpu.CompilerParams(
            dimension_semantics=("parallel",)   # batch outputs are disjoint
        ),
    )(src, x, w, bias, mask_token)

    return out[..., :D] if Dp != D else out


def reference(x, ids_restore, w, bias, mask_token):
    """Pure-JAX reference mirroring the PyTorch forward."""
    xp = jnp.einsum("bte,ed->btd", x, w) + bias          # Linear
    B, N_tok, D = xp.shape
    L = ids_restore.shape[1]
    mask_tokens = jnp.broadcast_to(mask_token.reshape(1, 1, D),
                                   (B, L + 1 - N_tok, D))
    x_ = jnp.concatenate([xp[:, 1:, :], mask_tokens], axis=1)
    idx = jnp.broadcast_to(ids_restore[..., None].astype(jnp.int32), (B, L, D))
    x_ = jnp.take_along_axis(x_, idx, axis=1)
    return jnp.concatenate([xp[:, :1, :], x_], axis=1)


if __name__ == "__main__":
    # Small shapes consistent with MAE usage:
    #   Encoder_emb_dim = 32, Decoder_emb_dim = 32, L_full = 16 patches,
    #   6 visible patches + 1 cls token => x: [2, 7, 32], ids_restore: [2, 16]
    B, N_VIS, L_FULL = 2, 6, 16
    E_ENC, D_DEC = 32, 32

    key = jax.random.PRNGKey(0)
    kx, kw, kb, km, kp = jax.random.split(key, 5)

    x = jax.random.normal(kx, (B, N_VIS + 1, E_ENC), dtype=jnp.float32)

    # PyTorch stores the Linear weight as [D, E]; we keep the transposed
    # [E, D] layout so the kernel computes x @ W + b directly.
    w = jax.random.normal(kw, (E_ENC, D_DEC), dtype=jnp.float32) * 0.02
    bias = jax.random.normal(kb, (1, D_DEC), dtype=jnp.float32) * 0.02
    # nn.Parameter(torch.zeros(1,1,D)) in __init__; use small non-zero values
    # here so the mask-token path is actually exercised by the check.
    mask_token = jax.random.normal(km, (1, D_DEC), dtype=jnp.float32) * 0.02

    # ids_restore: per-batch permutation of [0, L_FULL)
    ids_restore = jnp.stack(
        [jax.random.permutation(jax.random.fold_in(kp, i), L_FULL) for i in range(B)]
    ).astype(jnp.int32)

    out = encoder_to_decoder(x, ids_restore, w, bias, mask_token)
    out = jax.block_until_ready(out)

    ref = reference(x, ids_restore, w, bias, mask_token)
    assert out.shape == (B, L_FULL + 1, D_DEC), out.shape
    assert jnp.allclose(out, ref, atol=1e-5, rtol=1e-5), float(
        jnp.max(jnp.abs(out - ref))
    )
    print("KERNEL_OK")
</pallas_src>

<mosaic_0001>
module attributes {stable_mosaic.version = 11 : i64} {
  func.func @enc2dec_kernel(%arg0: i32, %arg1: memref<2x17x1xi32, #tpu.memory_space<vmem>>, %arg2: memref<2x7x32xf32, #tpu.memory_space<vmem>>, %arg3: memref<32x128xf32, #tpu.memory_space<vmem>>, %arg4: memref<1x128xf32, #tpu.memory_space<vmem>>, %arg5: memref<1x128xf32, #tpu.memory_space<vmem>>, %arg6: memref<2x17x128xf32, #tpu.memory_space<vmem>>) attributes {dimension_semantics = [#tpu.dimension_semantics<parallel>], iteration_bounds = array<i64: 1>, scalar_prefetch = 0 : i64, scratch_operands = 0 : i64, tpu.core_type = #tpu.core_type<tc>, window_params = [{transform_indices = @transform_0, window_bounds = array<i64: 2, 17, 1>}, {transform_indices = @transform_1, window_bounds = array<i64: 2, 7, 32>}, {pipeline_mode = #tpu.pipeline_mode<synchronous>, transform_indices = @transform_2, window_bounds = array<i64: 32, 128>}, {pipeline_mode = #tpu.pipeline_mode<synchronous>, transform_indices = @transform_3, window_bounds = array<i64: 1, 128>}, {pipeline_mode = #tpu.pipeline_mode<synchronous>, transform_indices = @transform_4, window_bounds = array<i64: 1, 128>}, {transform_indices = @transform_5, window_bounds = array<i64: 2, 17, 128>}]} {
    %c0 = arith.constant 0 : index
    %c0_0 = arith.constant 0 : index
    %0 = vector.load %arg3[%c0, %c0_0] : memref<32x128xf32, #tpu.memory_space<vmem>>, vector<32x128xf32>
    %c0_1 = arith.constant 0 : index
    %c0_2 = arith.constant 0 : index
    %1 = vector.load %arg4[%c0_1, %c0_2] : memref<1x128xf32, #tpu.memory_space<vmem>>, vector<1x128xf32>
    %c0_3 = arith.constant 0 : index
    %c0_4 = arith.constant 0 : index
    %2 = vector.load %arg5[%c0_3, %c0_4] : memref<1x128xf32, #tpu.memory_space<vmem>>, vector<1x128xf32>
    %3 = tpu.iota {dimensions = array<i32: 1>} : vector<17x7xi32>
    %c0_5 = arith.constant 0 : index
    %c0_6 = arith.constant 0 : index
    %c0_7 = arith.constant 0 : index
    %4 = vector.load %arg2[%c0_5, %c0_6, %c0_7] : memref<2x7x32xf32, #tpu.memory_space<vmem>>, vector<1x7x32xf32>
    %5 = vector.shape_cast %4 : vector<1x7x32xf32> to vector<7x32xf32>
    %cst = arith.constant dense<0.000000e+00> : vector<7x128xf32>
    %6 = tpu.matmul %5, %0, %cst {dimension_numbers = #tpu.dot_dimension_numbers<[1], [0], [0], [1], [0, 0, 1, 1], [], []>} : vector<7x32xf32>, vector<32x128xf32>, vector<7x128xf32> -> vector<7x128xf32>
    %7 = vector.broadcast %1 : vector<1x128xf32> to vector<7x128xf32>
    %8 = arith.addf %6, %7 : vector<7x128xf32>
    %c0_8 = arith.constant 0 : index
    %c0_9 = arith.constant 0 : index
    %c0_10 = arith.constant 0 : index
    %9 = vector.load %arg1[%c0_8, %c0_9, %c0_10] : memref<2x17x1xi32, #tpu.memory_space<vmem>>, vector<1x17x1xi32>
    %10 = vector.shape_cast %9 : vector<1x17x1xi32> to vector<17x1xi32>
    %11 = vector.broadcast %10 : vector<17x1xi32> to vector<17x7xi32>
    %12 = arith.cmpi eq, %11, %3 : vector<17x7xi32>
    %13 = arith.extui %12 : vector<17x7xi1> to vector<17x7xi32>
    %14 = arith.sitofp %13 : vector<17x7xi32> to vector<17x7xf32>
    %cst_11 = arith.constant dense<0.000000e+00> : vector<17x128xf32>
    %15 = tpu.matmul %14, %8, %cst_11 {dimension_numbers = #tpu.dot_dimension_numbers<[1], [0], [0], [1], [0, 0, 1, 1], [], []>} : vector<17x7xf32>, vector<7x128xf32>, vector<17x128xf32> -> vector<17x128xf32>
    %c0_i32 = arith.constant 0 : i32
    %16 = vector.broadcast %c0_i32 : i32 to vector<17x1xi32>
    %17 = arith.cmpi slt, %10, %16 : vector<17x1xi32>
    %18 = vector.shape_cast %17 : vector<17x1xi1> to vector<17x1xi1>
    %19 = vector.broadcast %18 : vector<17x1xi1> to vector<17x128xi1>
    %20 = vector.shape_cast %2 : vector<1x128xf32> to vector<1x128xf32>
    %21 = vector.broadcast %20 : vector<1x128xf32> to vector<17x128xf32>
    %22 = arith.select %19, %21, %15 : vector<17x128xi1>, vector<17x128xf32>
    %c0_12 = arith.constant 0 : index
    %c0_13 = arith.constant 0 : index
    %c0_14 = arith.constant 0 : index
    %23 = vector.load %arg6[%c0_12, %c0_13, %c0_14] : memref<2x17x128xf32, #tpu.memory_space<vmem>>, vector<1x17x128xf32>
    %24 = vector.shape_cast %23 : vector<1x17x128xf32> to vector<17x128xf32>
    %25 = vector.shape_cast %22 : vector<17x128xf32> to vector<1x17x128xf32>
    tpu.vector_store %arg6[%c0_12, %c0_13, %c0_14], %25 {strides = array<i32>} : memref<2x17x128xf32, #tpu.memory_space<vmem>>, vector<1x17x128xf32>,
    %c1 = arith.constant 1 : index
    %c0_15 = arith.constant 0 : index
    %c0_16 = arith.constant 0 : index
    %26 = vector.load %arg2[%c1, %c0_15, %c0_16] : memref<2x7x32xf32, #tpu.memory_space<vmem>>, vector<1x7x32xf32>
    %27 = vector.shape_cast %26 : vector<1x7x32xf32> to vector<7x32xf32>
    %cst_17 = arith.constant dense<0.000000e+00> : vector<7x128xf32>
    %28 = tpu.matmul %27, %0, %cst_17 {dimension_numbers = #tpu.dot_dimension_numbers<[1], [0], [0], [1], [0, 0, 1, 1], [], []>} : vector<7x32xf32>, vector<32x128xf32>, vector<7x128xf32> -> vector<7x128xf32>
    %29 = vector.broadcast %1 : vector<1x128xf32> to vector<7x128xf32>
    %30 = arith.addf %28, %29 : vector<7x128xf32>
    %c1_18 = arith.constant 1 : index
    %c0_19 = arith.constant 0 : index
    %c0_20 = arith.constant 0 : index
    %31 = vector.load %arg1[%c1_18, %c0_19, %c0_20] : memref<2x17x1xi32, #tpu.memory_space<vmem>>, vector<1x17x1xi32>
    %32 = vector.shape_cast %31 : vector<1x17x1xi32> to vector<17x1xi32>
    %33 = vector.broadcast %32 : vector<17x1xi32> to vector<17x7xi32>
    %34 = arith.cmpi eq, %33, %3 : vector<17x7xi32>
    %35 = arith.extui %34 : vector<17x7xi1> to vector<17x7xi32>
    %36 = arith.sitofp %35 : vector<17x7xi32> to vector<17x7xf32>
    %cst_21 = arith.constant dense<0.000000e+00> : vector<17x128xf32>
    %37 = tpu.matmul %36, %30, %cst_21 {dimension_numbers = #tpu.dot_dimension_numbers<[1], [0], [0], [1], [0, 0, 1, 1], [], []>} : vector<17x7xf32>, vector<7x128xf32>, vector<17x128xf32> -> vector<17x128xf32>
    %c0_i32_22 = arith.constant 0 : i32
    %38 = vector.broadcast %c0_i32_22 : i32 to vector<17x1xi32>
    %39 = arith.cmpi slt, %32, %38 : vector<17x1xi32>
    %40 = vector.shape_cast %39 : vector<17x1xi1> to vector<17x1xi1>
    %41 = vector.broadcast %40 : vector<17x1xi1> to vector<17x128xi1>
    %42 = vector.shape_cast %2 : vector<1x128xf32> to vector<1x128xf32>
    %43 = vector.broadcast %42 : vector<1x128xf32> to vector<17x128xf32>
    %44 = arith.select %41, %43, %37 : vector<17x128xi1>, vector<17x128xf32>
    %c1_23 = arith.constant 1 : index
    %c0_24 = arith.constant 0 : index
    %c0_25 = arith.constant 0 : index
    %45 = vector.load %arg6[%c1_23, %c0_24, %c0_25] : memref<2x17x128xf32, #tpu.memory_space<vmem>>, vector<1x17x128xf32>
    %46 = vector.shape_cast %45 : vector<1x17x128xf32> to vector<17x128xf32>
    %47 = vector.shape_cast %44 : vector<17x128xf32> to vector<1x17x128xf32>
    tpu.vector_store %arg6[%c1_23, %c0_24, %c0_25], %47 {strides = array<i32>} : memref<2x17x128xf32, #tpu.memory_space<vmem>>, vector<1x17x128xf32>,
    return
  }
  func.func @transform_0(%arg0: i32) -> (i32, i32, i32) {
    %c0_i32 = arith.constant 0 : i32
    %c0_i32_0 = arith.constant 0 : i32
    %c0_i32_1 = arith.constant 0 : i32
    return %arg0, %c0_i32, %c0_i32_0 : i32, i32, i32
  }
  func.func @transform_1(%arg0: i32) -> (i32, i32, i32) {
    %c0_i32 = arith.constant 0 : i32
    %c0_i32_0 = arith.constant 0 : i32
    %c0_i32_1 = arith.constant 0 : i32
    return %arg0, %c0_i32, %c0_i32_0 : i32, i32, i32
  }
  func.func @transform_2(%arg0: i32) -> (i32, i32) {
    %c0_i32 = arith.constant 0 : i32
    %c0_i32_0 = arith.constant 0 : i32
    %c0_i32_1 = arith.constant 0 : i32
    return %c0_i32, %c0_i32_0 : i32, i32
  }
  func.func @transform_3(%arg0: i32) -> (i32, i32) {
    %c0_i32 = arith.constant 0 : i32
    %c0_i32_0 = arith.constant 0 : i32
    %c0_i32_1 = arith.constant 0 : i32
    return %c0_i32, %c0_i32_0 : i32, i32
  }
  func.func @transform_4(%arg0: i32) -> (i32, i32) {
    %c0_i32 = arith.constant 0 : i32
    %c0_i32_0 = arith.constant 0 : i32
    %c0_i32_1 = arith.constant 0 : i32
    return %c0_i32, %c0_i32_0 : i32, i32
  }
  func.func @transform_5(%arg0: i32) -> (i32, i32, i32) {
    %c0_i32 = arith.constant 0 : i32
    %c0_i32_0 = arith.constant 0 : i32
    %c0_i32_1 = arith.constant 0 : i32
    return %arg0, %c0_i32, %c0_i32_0 : i32, i32, i32
  }
}

</mosaic_0001>

<llo_original>
// kernel: tpu_custom_call.1
$region0: #{tpu_custom_call.1}
  #allocation0 [shape = 'u32[]', space=smem, size = 0x4, offset = 0x4, fixed_abs, tag = 'smem constant byte address 0x4 - core index']
  #allocation1 [shape = 'u32[72,128]{1,0:T(1,128)}', space=vmem, size = 0x9000, scoped, tag = 'internal scratch']
  %s0 = inlined_call_operand.vmem [shape: s32[2,17,1], index: 0, kind: input, shape index: {}]
  %s1 = inlined_call_operand.vmem [shape: f32[2,7,32], index: 1, kind: input, shape index: {}]
  %s2 = inlined_call_operand.vmem [shape: f32[32,128], index: 2, kind: input, shape index: {}]
  %s3 = inlined_call_operand.vmem [shape: f32[1,128], index: 3, kind: input, shape index: {}]
  %s4 = inlined_call_operand.vmem [shape: f32[1,128], index: 4, kind: input, shape index: {}]
  %s5 = inlined_call_operand.vmem [shape: f32[2,17,128], index: 5, kind: output, shape index: {}]
  %s6 = sld [smem:[#allocation0]]
  $region30: #{tpu_custom_call.1} parent=0
    _
  %s8 = ssub.s32 1, %s6
  %s9 = scalar_select 0, %s8, %s6
  // Predicated region
  $region2: #{tpu_custom_call.1} parent=0 // pred_check
    _
  $region3: #{tpu_custom_call.1} parent=0 // pred_check_branch
    %11 = sbr.rel (0) target = $region5
  $region4: #{tpu_custom_call.1} parent=0 // pred_region
    _
  $region5: #{tpu_custom_call.1} parent=0 // pred_fallthru
    _
  // Predicated region
  $region6: #{tpu_custom_call.1} parent=0 // pred_check
    _
  $region7: #{tpu_custom_call.1} parent=0 // pred_check_branch
    %13 = sbr.rel (0) target = $region9
  $region8: #{tpu_custom_call.1} parent=0 // pred_region
    _
  $region9: #{tpu_custom_call.1} parent=0 // pred_fallthru
    _
  // Predicated region
  $region10: #{tpu_custom_call.1} parent=0 // pred_check
    _
  $region11: #{tpu_custom_call.1} parent=0 // pred_check_branch
    %15 = sbr.rel (0) target = $region13
  $region12: #{tpu_custom_call.1} parent=0 // pred_region
    _
  $region13: #{tpu_custom_call.1} parent=0 // pred_fallthru
    _
  // Predicated region
  $region14: #{tpu_custom_call.1} parent=0 // pred_check
    _
  $region15: #{tpu_custom_call.1} parent=0 // pred_check_branch
    %17 = sbr.rel (0) target = $region17
  $region16: #{tpu_custom_call.1} parent=0 // pred_region
    _
  $region17: #{tpu_custom_call.1} parent=0 // pred_fallthru
    _
  // Predicated region
  $region18: #{tpu_custom_call.1} parent=0 // pred_check
    _
  $region19: #{tpu_custom_call.1} parent=0 // pred_check_branch
    %19 = sbr.rel (0) target = $region21
  $region20: #{tpu_custom_call.1} parent=0 // pred_region
    _
  $region21: #{tpu_custom_call.1} parent=0 // pred_fallthru
    _
  %v20 = vld [vmem:[%s2] sm:$0xff]
  %v21 = vld [vmem:[%s2 + $0x8] sm:$0xff]
  %v22 = vld [vmem:[%s2 + $0x10] sm:$0xff]
  %v23 = vld [vmem:[%s2 + $0x18] sm:$0xff]
  %v24 = vld [vmem:[%s3] sm:$0x1]
  %v25 = vld [vmem:[%s4] sm:$0x1]
  %v26 = vlaneseq
  %v27 = vand.u32 %v26, 127
  %v28 = vld [vmem:[%s1] sm:$0x7f]
  %v30 = vperm.slane %v24, 0
  %vm32 = vcmask 261120
  %v34 = vsel %vm32, %v28, 0
  %36 = vmatpush.msra.mxu0 0.0
  %37 = vmatpush.msra.mxu0 0.0
  %38 = vmatpush.msra.mxu0 0.0
  %39 = vmatpush.msra.mxu0 0.0
  %40 = vmatpush.msra.mxu0 0.0
  %41 = vmatpush.msra.mxu0 0.0
  %42 = vmatpush.msra.mxu0 0.0
  %43 = vmatpush.msra.mxu0 0.0
  %44 = vmatpush.msra.mxu0 0.0
  %45 = vmatpush.msra.mxu0 0.0
  %46 = vmatpush.msra.mxu0 0.0
  %47 = vmatpush.msra.mxu0 0.0
  %48 = vmatpush.msra.mxu0 %v23
  %49 = vmatpush.msra.mxu0 %v22
  %50 = vmatpush.msra.mxu0 %v21
  %51 = vmatpush.msra.mxu0 %v20
  %52 = vmatmul.f32.gmra.mxu0 %v34
  %v53 = vpop.f32.mrf.mxu0
  %v54 = vadd.f32 %v30, %v53
  %55 = vdwg.mxu0
  %v56 = vld [vmem:[%s0] sm:$0xff]
  %v57 = vld [vmem:[%s0 + $0x8] sm:$0xff]
  %v58 = vld [vmem:[%s0 + $0x10] sm:$0x1]
  %59 = vset.pattern.permute.xlu0 0
  %60 = vperm.xlu0 %59, %v56
  %v61 = vpop.permute.xlu0 %60
  %62 = vset.pattern.permute.xlu0 0
  %63 = vperm.xlu0 %62, %v57
  %v64 = vpop.permute.xlu0 %63
  %65 = vset.pattern.permute.xlu0 0
  %66 = vperm.xlu0 %65, %v58
  %v67 = vpop.permute.xlu0 %66
  %vm68 = vcmp.eq.s32.totalorder %v61, %v27
  %vm69 = vcmp.eq.s32.totalorder %v64, %v27
  %vm70 = vcmp.eq.s32.totalorder %v67, %v27
  %v71 = vsel %vm68, 1, 0
  %v72 = vsel %vm69, 1, 0
  %v73 = vsel %vm70, 1, 0
  %v74 = vcvt.s32.f32 %v71
  %v75 = vcvt.s32.f32 %v72
  %v76 = vcvt.s32.f32 %v73
  %vm77 = vcmask 56320
  %v79 = vsel %vm77, %v74, 0
  %v82 = vsel %vm77, %v75, 0
  %v85 = vsel %vm77, %v76, 0
  %vm87 = vcmask 1046528
  %v89 = vsel %vm87, %v54, 0
  %91 = vmatpush.msra.mxu0 0.0
  %92 = vmatpush.msra.mxu0 0.0
  %93 = vmatpush.msra.mxu0 0.0
  %94 = vmatpush.msra.mxu0 0.0
  %95 = vmatpush.msra.mxu0 0.0
  %96 = vmatpush.msra.mxu0 0.0
  %97 = vmatpush.msra.mxu0 0.0
  %98 = vmatpush.msra.mxu0 0.0
  %99 = vmatpush.msra.mxu0 0.0
  %100 = vmatpush.msra.mxu0 0.0
  %101 = vmatpush.msra.mxu0 0.0
  %102 = vmatpush.msra.mxu0 0.0
  %103 = vmatpush.msra.mxu0 0.0
  %104 = vmatpush.msra.mxu0 0.0
  %105 = vmatpush.msra.mxu0 0.0
  %106 = vmatpush.msra.mxu0 %v89
  %107 = vmatmul.f32.gmra.mxu0 %v79
  %v108 = vpop.f32.mrf.mxu0
  %v109 = vadd.f32 0.0, %v108
  %110 = vmatmul.f32.gmra.mxu0 %v82
  %v111 = vpop.f32.mrf.mxu0
  %v112 = vadd.f32 0.0, %v111
  %113 = vmatmul.f32.gmra.mxu0 %v85
  %v114 = vpop.f32.mrf.mxu0
  %v115 = vadd.f32 0.0, %v114
  %116 = vdwg.mxu0
  %vm117 = vcmp.lt.s32.totalorder %v56, 0
  %vm118 = vcmp.lt.s32.totalorder %v57, 0
  %vm119 = vcmp.lt.s32.totalorder %v58, 0
  %v120 = vsel %vm117, 1, 0
  %v121 = vsel %vm118, 1, 0
  %v122 = vsel %vm119, 1, 0
  %123 = vset.pattern.permute.xlu0 0
  %124 = vperm.xlu0 %123, %v120
  %v125 = vpop.permute.xlu0 %124
  %126 = vset.pattern.permute.xlu0 0
  %127 = vperm.xlu0 %126, %v121
  %v128 = vpop.permute.xlu0 %127
  %129 = vset.pattern.permute.xlu0 0
  %130 = vperm.xlu0 %129, %v122
  %v131 = vpop.permute.xlu0 %130
  %vm132 = vcmp.eq.s32.totalorder %v125, 1
  %vm133 = vcmp.eq.s32.totalorder %v128, 1
  %vm134 = vcmp.eq.s32.totalorder %v131, 1
  %v136 = vperm.slane %v25, 0
  %v138 = vsel %vm132, %v136, %v109
  %v139 = vsel %vm133, %v136, %v112
  %v140 = vsel %vm134, %v136, %v115
  %141 = vst [vmem:[%s5] sm:$0xff] %v138
  %142 = vst [vmem:[%s5 + $0x8] sm:$0xff] %v139
  %143 = vst [vmem:[%s5 + $0x10] sm:$0x1] %v140
  %s144 = scalar_lea.vmem %s1, 8
  %v145 = vld [vmem:[%s144] sm:$0x7f]
  %v147 = vsel %vm32, %v145, 0
  %149 = vmatpush.msra.mxu0 0.0
  %150 = vmatpush.msra.mxu0 0.0
  %151 = vmatpush.msra.mxu0 0.0
  %152 = vmatpush.msra.mxu0 0.0
  %153 = vmatpush.msra.mxu0 0.0
  %154 = vmatpush.msra.mxu0 0.0
  %155 = vmatpush.msra.mxu0 0.0
  %156 = vmatpush.msra.mxu0 0.0
  %157 = vmatpush.msra.mxu0 0.0
  %158 = vmatpush.msra.mxu0 0.0
  %159 = vmatpush.msra.mxu0 0.0
  %160 = vmatpush.msra.mxu0 0.0
  %161 = vmatpush.msra.mxu0 %v23
  %162 = vmatpush.msra.mxu0 %v22
  %163 = vmatpush.msra.mxu0 %v21
  %164 = vmatpush.msra.mxu0 %v20
  %165 = vmatmul.f32.gmra.mxu0 %v147
  %v166 = vpop.f32.mrf.mxu0
  %v167 = vadd.f32 %v30, %v166
  %168 = vdwg.mxu0
  %s169 = scalar_lea.vmem %s0, 24
  %v170 = vld [vmem:[%s169] sm:$0xff]
  %v171 = vld [vmem:[%s169 + $0x8] sm:$0xff]
  %v172 = vld [vmem:[%s169 + $0x10] sm:$0x1]
  %173 = vset.pattern.permute.xlu0 0
  %174 = vperm.xlu0 %173, %v170
  %v175 = vpop.permute.xlu0 %174
  %176 = vset.pattern.permute.xlu0 0
  %177 = vperm.xlu0 %176, %v171
  %v178 = vpop.permute.xlu0 %177
  %179 = vset.pattern.permute.xlu0 0
  %180 = vperm.xlu0 %179, %v172
  %v181 = vpop.permute.xlu0 %180
  %vm182 = vcmp.eq.s32.totalorder %v175, %v27
  %vm183 = vcmp.eq.s32.totalorder %v178, %v27
  %vm184 = vcmp.eq.s32.totalorder %v181, %v27
  %v185 = vsel %vm182, 1, 0
  %v186 = vsel %vm183, 1, 0
  %v187 = vsel %vm184, 1, 0
  %v188 = vcvt.s32.f32 %v185
  %v189 = vcvt.s32.f32 %v186
  %v190 = vcvt.s32.f32 %v187
  %v192 = vsel %vm77, %v188, 0
  %v195 = vsel %vm77, %v189, 0
  %v198 = vsel %vm77, %v190, 0
  %v201 = vsel %vm87, %v167, 0
  %203 = vmatpush.msra.mxu0 0.0
  %204 = vmatpush.msra.mxu0 0.0
  %205 = vmatpush.msra.mxu0 0.0
  %206 = vmatpush.msra.mxu0 0.0
  %207 = vmatpush.msra.mxu0 0.0
  %208 = vmatpush.msra.mxu0 0.0
  %209 = vmatpush.msra.mxu0 0.0
  %210 = vmatpush.msra.mxu0 0.0
  %211 = vmatpush.msra.mxu0 0.0
  %212 = vmatpush.msra.mxu0 0.0
  %213 = vmatpush.msra.mxu0 0.0
  %214 = vmatpush.msra.mxu0 0.0
  %215 = vmatpush.msra.mxu0 0.0
  %216 = vmatpush.msra.mxu0 0.0
  %217 = vmatpush.msra.mxu0 0.0
  %218 = vmatpush.msra.mxu0 %v201
  %219 = vmatmul.f32.gmra.mxu0 %v192
  %v220 = vpop.f32.mrf.mxu0
  %v221 = vadd.f32 0.0, %v220
  %222 = vmatmul.f32.gmra.mxu0 %v195
  %v223 = vpop.f32.mrf.mxu0
  %v224 = vadd.f32 0.0, %v223
  %225 = vmatmul.f32.gmra.mxu0 %v198
  %v226 = vpop.f32.mrf.mxu0
  %v227 = vadd.f32 0.0, %v226
  %228 = vdwg.mxu0
  %vm229 = vcmp.lt.s32.totalorder %v170, 0
  %vm230 = vcmp.lt.s32.totalorder %v171, 0
  %vm231 = vcmp.lt.s32.totalorder %v172, 0
  %v232 = vsel %vm229, 1, 0
  %v233 = vsel %vm230, 1, 0
  %v234 = vsel %vm231, 1, 0
  %235 = vset.pattern.permute.xlu0 0
  %236 = vperm.xlu0 %235, %v232
  %v237 = vpop.permute.xlu0 %236
  %238 = vset.pattern.permute.xlu0 0
  %239 = vperm.xlu0 %238, %v233
  %v240 = vpop.permute.xlu0 %239
  %241 = vset.pattern.permute.xlu0 0
  %242 = vperm.xlu0 %241, %v234
  %v243 = vpop.permute.xlu0 %242
  %vm244 = vcmp.eq.s32.totalorder %v237, 1
  %vm245 = vcmp.eq.s32.totalorder %v240, 1
  %vm246 = vcmp.eq.s32.totalorder %v243, 1
  %v247 = vsel %vm244, %v136, %v221
  %v248 = vsel %vm245, %v136, %v224
  %v249 = vsel %vm246, %v136, %v227
  %s250 = scalar_lea.vmem %s5, 24
  %251 = vst [vmem:[%s250] sm:$0xff] %v247
  %252 = vst [vmem:[%s250 + $0x8] sm:$0xff] %v248
  %253 = vst [vmem:[%s250 + $0x10] sm:$0x1] %v249
  // Predicated region
  $region22: #{tpu_custom_call.1} parent=0 // pred_check
    _
  $region23: #{tpu_custom_call.1} parent=0 // pred_check_branch
    %255 = sbr.rel (0) target = $region25
  $region24: #{tpu_custom_call.1} parent=0 // pred_region
    _
  $region25: #{tpu_custom_call.1} parent=0 // pred_fallthru
    _
  // Predicated region
  $region26: #{tpu_custom_call.1} parent=0 // pred_check
    _
  $region27: #{tpu_custom_call.1} parent=0 // pred_check_branch
    %257 = sbr.rel (0) target = $region29
  $region28: #{tpu_custom_call.1} parent=0 // pred_region
    _
  $region29: #{tpu_custom_call.1} parent=0 // pred_fallthru
    _

</llo_original>
